<compile_context>
chip_gen: v7x
topology: tpu7x:2x2x1
jax: 0.10.0
libtpu: 0.0.40
codegen_flags: <defaults>
</compile_context>

<pallas_src>
import functools

import jax
import jax.numpy as jnp
from jax import lax
from jax.experimental import pallas as pl
from jax.experimental.pallas import tpu as pltpu


def _round_up(a, b):
    return (a + b - 1) // b * b


def _conv_taps_kernel(xa_ref, xb_ref, w_ref, shift_ref, o_ref, *,
                      kH, kW, Wp, apply_relu):
    # xa_ref/xb_ref: (1, Cin, tile_p) bf16 -- current and next flat-spatial block
    #                (the next block supplies the halo for the shifted taps).
    # w_ref:         (kH*kW, Cout, Cin) bf16 per-tap weights (BN scale folded in)
    # shift_ref:     (Cout, 1) f32 per-channel shift (bias / folded BN)
    # o_ref:         (1, Cout, tile_p) f32 output block (lane-dense stores)
    xa = xa_ref[0]                                    # (Cin, tile_p)
    xb = xb_ref[0]
    tile_p = xa.shape[-1]
    xcat = jnp.concatenate([xa, xb], axis=-1)         # (Cin, 2*tile_p) in VMEM

    acc = None
    for kh in range(kH):
        for kw in range(kW):
            kk = kh * kW + kw
            d = kh * Wp + kw                          # static lane offset of this tap
            xs = xcat[:, d:d + tile_p]                # (Cin, tile_p) shifted window
            part = jnp.dot(w_ref[kk], xs,
                           preferred_element_type=jnp.float32)   # (Cout, tile_p)
            acc = part if acc is None else acc + part

    y = acc + shift_ref[...]                          # per-channel shift, f32
    if apply_relu:
        y = jnp.maximum(y, 0.0)
    o_ref[0] = y.astype(o_ref.dtype)


def conv2d_forward(x, weight, bias, *, stride=1, relu=True, same_padding=False,
                   bn=False, bn_gamma=None, bn_beta=None, bn_mean=None,
                   bn_var=None, eps=1e-3, tile_p=512):
    """Forward pass matching MCNN Conv2d: conv(+bias) -> (BN eval) -> (ReLU)."""
    N, Cin, H, W = x.shape
    Cout, Cin_w, kH, kW = weight.shape
    assert Cin_w == Cin
    pad = (kH - 1) // 2 if same_padding else 0
    Hp, Wp = H + 2 * pad, W + 2 * pad
    OH = (Hp - kH) // stride + 1
    OW = (Wp - kW) // stride + 1
    KK = kH * kW

    # ---- fold bias and (eval-mode) BatchNorm into a per-channel affine ----
    # NOTE: the reference module uses momentum=0, so running stats stay at their
    # init (mean=0, var=1); BN is applied with those running stats (eval mode).
    # TODO(synk): training-mode BN (batch statistics) is not implemented here.
    if bn:
        scale = (bn_gamma / jnp.sqrt(bn_var + eps)).astype(jnp.float32)
        shift = ((bias - bn_mean) * scale + bn_beta).astype(jnp.float32)
    else:
        scale = jnp.ones((Cout,), jnp.float32)
        shift = bias.astype(jnp.float32)

    # Per-tap weights, scale folded in, bf16 for the MXU.
    w_taps = (weight.astype(jnp.float32)
              .transpose(2, 3, 0, 1)                 # (kH, kW, Cout, Cin)
              .reshape(KK, Cout, Cin)
              * scale[None, :, None]).astype(jnp.bfloat16)
    shift_col = shift.reshape(Cout, 1)

    # ---- input prep: spatial pad, flatten spatial, tail pad (all cheap XLA) ----
    Dmax = (kH - 1) * Wp + (kW - 1)                  # largest tap offset
    P = Hp * Wp                                      # padded flat spatial size
    tp = min(tile_p, _round_up(P, 128))
    tp = max(tp, _round_up(max(Dmax, 1), 128), 128)
    tp = _round_up(tp, 128)
    n_pblk = (P + tp - 1) // tp
    P_tot = (n_pblk + 1) * tp                        # +1 block for the halo reads

    xp = jnp.pad(x.astype(jnp.bfloat16), ((0, 0), (0, 0), (pad, pad), (pad, pad)))
    xf = xp.reshape(N, Cin, P)
    xf = jnp.pad(xf, ((0, 0), (0, 0), (0, P_tot - P)))

    kernel = functools.partial(_conv_taps_kernel, kH=kH, kW=kW, Wp=Wp,
                               apply_relu=relu)

    flops = 2 * N * n_pblk * tp * Cin * KK * Cout
    bytes_accessed = (2 * xf.size * 2) + (w_taps.size * 2) + (N * Cout * n_pblk * tp * 4)

    out_flat = pl.pallas_call(
        kernel,
        out_shape=jax.ShapeDtypeStruct((N, Cout, n_pblk * tp), jnp.float32),
        grid_spec=pltpu.PrefetchScalarGridSpec(
            num_scalar_prefetch=0,
            grid=(N, n_pblk),
            in_specs=[
                pl.BlockSpec((1, Cin, tp), lambda n, pb: (n, 0, pb)),      # block pb
                pl.BlockSpec((1, Cin, tp), lambda n, pb: (n, 0, pb + 1)),  # halo block
                pl.BlockSpec((KK, Cout, Cin), lambda n, pb: (0, 0, 0)),    # weights
                pl.BlockSpec((Cout, 1), lambda n, pb: (0, 0)),             # shift
            ],
            out_specs=pl.BlockSpec((1, Cout, tp), lambda n, pb: (n, 0, pb)),
        ),
        compiler_params=pltpu.CompilerParams(
            dimension_semantics=("parallel", "parallel"),
            vmem_limit_bytes=48 * 1024 * 1024),
        cost_estimate=pl.CostEstimate(flops=flops, transcendentals=0,
                                      bytes_accessed=bytes_accessed),
    )(xf, xf, w_taps, shift_col)

    # Output is already channel-major: (N, Cout, padded flat spatial).
    out = out_flat[:, :, :P].reshape(N, Cout, Hp, Wp)
    out = out[:, :, ::stride, ::stride][:, :, :OH, :OW]    # cheap slice, no transpose
    return out


if __name__ == "__main__":
    # Module config: Conv2d(in_channels=4, out_channels=8, kernel_size=3,
    #                       stride=1, relu=True, same_padding=False, bn=False)
    N, Cin, H, W = 2, 4, 16, 16
    Cout, ksize = 8, 3
    relu, same_padding, bn = True, False, False

    key = jax.random.PRNGKey(0)
    kx, kw, kb = jax.random.split(key, 3)
    x = jax.random.normal(kx, (N, Cin, H, W), dtype=jnp.float32)
    weight = jax.random.normal(kw, (Cout, Cin, ksize, ksize), dtype=jnp.float32) * 0.1
    bias = jax.random.normal(kb, (Cout,), dtype=jnp.float32) * 0.1

    out = conv2d_forward(x, weight, bias, stride=1, relu=relu,
                         same_padding=same_padding, bn=bn)
    out = jax.block_until_ready(out)

    # Reference: XLA conv on the same bf16-rounded operands (the kernel feeds the
    # MXU bf16 inputs with f32 accumulation), + bias, + ReLU.
    x_q = x.astype(jnp.bfloat16).astype(jnp.float32)
    w_q = weight.astype(jnp.bfloat16).astype(jnp.float32)
    ref = lax.conv_general_dilated(
        x_q, w_q, window_strides=(1, 1), padding="VALID",
        dimension_numbers=("NCHW", "OIHW", "NCHW"),
        precision=lax.Precision.HIGHEST)
    ref = ref + bias.reshape(1, Cout, 1, 1)
    if relu:
        ref = jnp.maximum(ref, 0.0)

    assert out.shape == ref.shape, (out.shape, ref.shape)
    assert jnp.allclose(out, ref, rtol=1e-3, atol=1e-3), float(jnp.max(jnp.abs(out - ref)))

    print("KERNEL_OK")
</pallas_src>

<mosaic_0001>
module attributes {stable_mosaic.version = 11 : i64} {
  func.func @_conv_taps_kernel(%arg0: i32, %arg1: i32, %arg2: memref<1x4x256xbf16, #tpu.memory_space<vmem>>, %arg3: memref<1x4x256xbf16, #tpu.memory_space<vmem>>, %arg4: memref<9x8x4xbf16, #tpu.memory_space<vmem>>, %arg5: memref<8x1xf32, #tpu.memory_space<vmem>>, %arg6: memref<1x8x256xf32, #tpu.memory_space<vmem>>) attributes {dimension_semantics = [#tpu.dimension_semantics<parallel>, #tpu.dimension_semantics<parallel>], iteration_bounds = array<i64: 2, 1>, scalar_prefetch = 0 : i64, scratch_operands = 0 : i64, tpu.core_type = #tpu.core_type<tc>, window_params = [{transform_indices = @transform_0, window_bounds = array<i64: 1, 4, 256>}, {transform_indices = @transform_1, window_bounds = array<i64: 1, 4, 256>}, {pipeline_mode = #tpu.pipeline_mode<synchronous>, transform_indices = @transform_2, window_bounds = array<i64: 9, 8, 4>}, {pipeline_mode = #tpu.pipeline_mode<synchronous>, transform_indices = @transform_3, window_bounds = array<i64: 8, 1>}, {transform_indices = @transform_4, window_bounds = array<i64: 1, 8, 256>}]} {
    %c0 = arith.constant 0 : index
    %c0_0 = arith.constant 0 : index
    %c0_1 = arith.constant 0 : index
    %0 = vector.load %arg2[%c0, %c0_0, %c0_1] : memref<1x4x256xbf16, #tpu.memory_space<vmem>>, vector<1x4x256xbf16>
    %1 = vector.shape_cast %0 : vector<1x4x256xbf16> to vector<4x256xbf16>
    %c0_2 = arith.constant 0 : index
    %c0_3 = arith.constant 0 : index
    %c0_4 = arith.constant 0 : index
    %2 = vector.load %arg3[%c0_2, %c0_3, %c0_4] : memref<1x4x256xbf16, #tpu.memory_space<vmem>>, vector<1x4x256xbf16>
    %3 = vector.shape_cast %2 : vector<1x4x256xbf16> to vector<4x256xbf16>
    %4 = tpu.concatenate %1, %3 in 1 : vector<4x256xbf16>, vector<4x256xbf16> -> vector<4x512xbf16>
    %5 = vector.extract_strided_slice %4 {offsets = [0, 0], sizes = [4, 256], strides = [1, 1]} : vector<4x512xbf16> to vector<4x256xbf16>
    %c0_5 = arith.constant 0 : index
    %c0_6 = arith.constant 0 : index
    %c0_7 = arith.constant 0 : index
    %6 = vector.load %arg4[%c0_5, %c0_6, %c0_7] : memref<9x8x4xbf16, #tpu.memory_space<vmem>>, vector<1x8x4xbf16>
    %7 = vector.shape_cast %6 : vector<1x8x4xbf16> to vector<8x4xbf16>
    %cst = arith.constant dense<0.000000e+00> : vector<8x256xf32>
    %8 = tpu.matmul %7, %5, %cst {dimension_numbers = #tpu.dot_dimension_numbers<[1], [0], [0], [1], [0, 0, 1, 1], [], []>} : vector<8x4xbf16>, vector<4x256xbf16>, vector<8x256xf32> -> vector<8x256xf32>
    %9 = vector.extract_strided_slice %4 {offsets = [0, 1], sizes = [4, 256], strides = [1, 1]} : vector<4x512xbf16> to vector<4x256xbf16>
    %c1 = arith.constant 1 : index
    %c0_8 = arith.constant 0 : index
    %c0_9 = arith.constant 0 : index
    %10 = vector.load %arg4[%c1, %c0_8, %c0_9] : memref<9x8x4xbf16, #tpu.memory_space<vmem>>, vector<1x8x4xbf16>
    %11 = vector.shape_cast %10 : vector<1x8x4xbf16> to vector<8x4xbf16>
    %cst_10 = arith.constant dense<0.000000e+00> : vector<8x256xf32>
    %12 = tpu.matmul %11, %9, %cst_10 {dimension_numbers = #tpu.dot_dimension_numbers<[1], [0], [0], [1], [0, 0, 1, 1], [], []>} : vector<8x4xbf16>, vector<4x256xbf16>, vector<8x256xf32> -> vector<8x256xf32>
    %13 = arith.addf %8, %12 : vector<8x256xf32>
    %14 = vector.extract_strided_slice %4 {offsets = [0, 2], sizes = [4, 256], strides = [1, 1]} : vector<4x512xbf16> to vector<4x256xbf16>
    %c2 = arith.constant 2 : index
    %c0_11 = arith.constant 0 : index
    %c0_12 = arith.constant 0 : index
    %15 = vector.load %arg4[%c2, %c0_11, %c0_12] : memref<9x8x4xbf16, #tpu.memory_space<vmem>>, vector<1x8x4xbf16>
    %16 = vector.shape_cast %15 : vector<1x8x4xbf16> to vector<8x4xbf16>
    %cst_13 = arith.constant dense<0.000000e+00> : vector<8x256xf32>
    %17 = tpu.matmul %16, %14, %cst_13 {dimension_numbers = #tpu.dot_dimension_numbers<[1], [0], [0], [1], [0, 0, 1, 1], [], []>} : vector<8x4xbf16>, vector<4x256xbf16>, vector<8x256xf32> -> vector<8x256xf32>
    %18 = arith.addf %13, %17 : vector<8x256xf32>
    %19 = vector.extract_strided_slice %4 {offsets = [0, 16], sizes = [4, 256], strides = [1, 1]} : vector<4x512xbf16> to vector<4x256xbf16>
    %c3 = arith.constant 3 : index
    %c0_14 = arith.constant 0 : index
    %c0_15 = arith.constant 0 : index
    %20 = vector.load %arg4[%c3, %c0_14, %c0_15] : memref<9x8x4xbf16, #tpu.memory_space<vmem>>, vector<1x8x4xbf16>
    %21 = vector.shape_cast %20 : vector<1x8x4xbf16> to vector<8x4xbf16>
    %cst_16 = arith.constant dense<0.000000e+00> : vector<8x256xf32>
    %22 = tpu.matmul %21, %19, %cst_16 {dimension_numbers = #tpu.dot_dimension_numbers<[1], [0], [0], [1], [0, 0, 1, 1], [], []>} : vector<8x4xbf16>, vector<4x256xbf16>, vector<8x256xf32> -> vector<8x256xf32>
    %23 = arith.addf %18, %22 : vector<8x256xf32>
    %24 = vector.extract_strided_slice %4 {offsets = [0, 17], sizes = [4, 256], strides = [1, 1]} : vector<4x512xbf16> to vector<4x256xbf16>
    %c4 = arith.constant 4 : index
    %c0_17 = arith.constant 0 : index
    %c0_18 = arith.constant 0 : index
    %25 = vector.load %arg4[%c4, %c0_17, %c0_18] : memref<9x8x4xbf16, #tpu.memory_space<vmem>>, vector<1x8x4xbf16>
    %26 = vector.shape_cast %25 : vector<1x8x4xbf16> to vector<8x4xbf16>
    %cst_19 = arith.constant dense<0.000000e+00> : vector<8x256xf32>
    %27 = tpu.matmul %26, %24, %cst_19 {dimension_numbers = #tpu.dot_dimension_numbers<[1], [0], [0], [1], [0, 0, 1, 1], [], []>} : vector<8x4xbf16>, vector<4x256xbf16>, vector<8x256xf32> -> vector<8x256xf32>
    %28 = arith.addf %23, %27 : vector<8x256xf32>
    %29 = vector.extract_strided_slice %4 {offsets = [0, 18], sizes = [4, 256], strides = [1, 1]} : vector<4x512xbf16> to vector<4x256xbf16>
    %c5 = arith.constant 5 : index
    %c0_20 = arith.constant 0 : index
    %c0_21 = arith.constant 0 : index
    %30 = vector.load %arg4[%c5, %c0_20, %c0_21] : memref<9x8x4xbf16, #tpu.memory_space<vmem>>, vector<1x8x4xbf16>
    %31 = vector.shape_cast %30 : vector<1x8x4xbf16> to vector<8x4xbf16>
    %cst_22 = arith.constant dense<0.000000e+00> : vector<8x256xf32>
    %32 = tpu.matmul %31, %29, %cst_22 {dimension_numbers = #tpu.dot_dimension_numbers<[1], [0], [0], [1], [0, 0, 1, 1], [], []>} : vector<8x4xbf16>, vector<4x256xbf16>, vector<8x256xf32> -> vector<8x256xf32>
    %33 = arith.addf %28, %32 : vector<8x256xf32>
    %34 = vector.extract_strided_slice %4 {offsets = [0, 32], sizes = [4, 256], strides = [1, 1]} : vector<4x512xbf16> to vector<4x256xbf16>
    %c6 = arith.constant 6 : index
    %c0_23 = arith.constant 0 : index
    %c0_24 = arith.constant 0 : index
    %35 = vector.load %arg4[%c6, %c0_23, %c0_24] : memref<9x8x4xbf16, #tpu.memory_space<vmem>>, vector<1x8x4xbf16>
    %36 = vector.shape_cast %35 : vector<1x8x4xbf16> to vector<8x4xbf16>
    %cst_25 = arith.constant dense<0.000000e+00> : vector<8x256xf32>
    %37 = tpu.matmul %36, %34, %cst_25 {dimension_numbers = #tpu.dot_dimension_numbers<[1], [0], [0], [1], [0, 0, 1, 1], [], []>} : vector<8x4xbf16>, vector<4x256xbf16>, vector<8x256xf32> -> vector<8x256xf32>
    %38 = arith.addf %33, %37 : vector<8x256xf32>
    %39 = vector.extract_strided_slice %4 {offsets = [0, 33], sizes = [4, 256], strides = [1, 1]} : vector<4x512xbf16> to vector<4x256xbf16>
    %c7 = arith.constant 7 : index
    %c0_26 = arith.constant 0 : index
    %c0_27 = arith.constant 0 : index
    %40 = vector.load %arg4[%c7, %c0_26, %c0_27] : memref<9x8x4xbf16, #tpu.memory_space<vmem>>, vector<1x8x4xbf16>
    %41 = vector.shape_cast %40 : vector<1x8x4xbf16> to vector<8x4xbf16>
    %cst_28 = arith.constant dense<0.000000e+00> : vector<8x256xf32>
    %42 = tpu.matmul %41, %39, %cst_28 {dimension_numbers = #tpu.dot_dimension_numbers<[1], [0], [0], [1], [0, 0, 1, 1], [], []>} : vector<8x4xbf16>, vector<4x256xbf16>, vector<8x256xf32> -> vector<8x256xf32>
    %43 = arith.addf %38, %42 : vector<8x256xf32>
    %44 = vector.extract_strided_slice %4 {offsets = [0, 34], sizes = [4, 256], strides = [1, 1]} : vector<4x512xbf16> to vector<4x256xbf16>
    %c8 = arith.constant 8 : index
    %c0_29 = arith.constant 0 : index
    %c0_30 = arith.constant 0 : index
    %45 = vector.load %arg4[%c8, %c0_29, %c0_30] : memref<9x8x4xbf16, #tpu.memory_space<vmem>>, vector<1x8x4xbf16>
    %46 = vector.shape_cast %45 : vector<1x8x4xbf16> to vector<8x4xbf16>
    %cst_31 = arith.constant dense<0.000000e+00> : vector<8x256xf32>
    %47 = tpu.matmul %46, %44, %cst_31 {dimension_numbers = #tpu.dot_dimension_numbers<[1], [0], [0], [1], [0, 0, 1, 1], [], []>} : vector<8x4xbf16>, vector<4x256xbf16>, vector<8x256xf32> -> vector<8x256xf32>
    %48 = arith.addf %43, %47 : vector<8x256xf32>
    %c0_32 = arith.constant 0 : index
    %c0_33 = arith.constant 0 : index
    %49 = vector.load %arg5[%c0_32, %c0_33] : memref<8x1xf32, #tpu.memory_space<vmem>>, vector<8x1xf32>
    %50 = vector.broadcast %49 : vector<8x1xf32> to vector<8x256xf32>
    %51 = arith.addf %48, %50 : vector<8x256xf32>
    %cst_34 = arith.constant 0.000000e+00 : f32
    %52 = vector.broadcast %cst_34 : f32 to vector<8x256xf32>
    %53 = arith.maximumf %51, %52 : vector<8x256xf32>
    %c0_35 = arith.constant 0 : index
    %c0_36 = arith.constant 0 : index
    %c0_37 = arith.constant 0 : index
    %54 = vector.load %arg6[%c0_35, %c0_36, %c0_37] : memref<1x8x256xf32, #tpu.memory_space<vmem>>, vector<1x8x256xf32>
    %55 = vector.shape_cast %54 : vector<1x8x256xf32> to vector<8x256xf32>
    %56 = vector.shape_cast %53 : vector<8x256xf32> to vector<1x8x256xf32>
    tpu.vector_store %arg6[%c0_35, %c0_36, %c0_37], %56 {strides = array<i32>} : memref<1x8x256xf32, #tpu.memory_space<vmem>>, vector<1x8x256xf32>,
    return
  }
  func.func @transform_0(%arg0: i32, %arg1: i32) -> (i32, i32, i32) {
    %c0_i32 = arith.constant 0 : i32
    %c0_i32_0 = arith.constant 0 : i32
    return %arg0, %c0_i32, %arg1 : i32, i32, i32
  }
  func.func @transform_1(%arg0: i32, %arg1: i32) -> (i32, i32, i32) {
    %c1_i32 = arith.constant 1 : i32
    %0 = arith.addi %arg1, %c1_i32 : i32
    %c0_i32 = arith.constant 0 : i32
    %c0_i32_0 = arith.constant 0 : i32
    return %arg0, %c0_i32, %0 : i32, i32, i32
  }
  func.func @transform_2(%arg0: i32, %arg1: i32) -> (i32, i32, i32) {
    %c0_i32 = arith.constant 0 : i32
    %c0_i32_0 = arith.constant 0 : i32
    %c0_i32_1 = arith.constant 0 : i32
    %c0_i32_2 = arith.constant 0 : i32
    return %c0_i32, %c0_i32_0, %c0_i32_1 : i32, i32, i32
  }
  func.func @transform_3(%arg0: i32, %arg1: i32) -> (i32, i32) {
    %c0_i32 = arith.constant 0 : i32
    %c0_i32_0 = arith.constant 0 : i32
    %c0_i32_1 = arith.constant 0 : i32
    return %c0_i32, %c0_i32_0 : i32, i32
  }
  func.func @transform_4(%arg0: i32, %arg1: i32) -> (i32, i32, i32) {
    %c0_i32 = arith.constant 0 : i32
    %c0_i32_0 = arith.constant 0 : i32
    return %arg0, %c0_i32, %arg1 : i32, i32, i32
  }
}

</mosaic_0001>

<llo_original>
// kernel: tpu_custom_call.1
$region0: #{tpu_custom_call.1}
  #allocation0 [shape = 'u32[]', space=smem, size = 0x4, offset = 0x4, fixed_abs, tag = 'smem constant byte address 0x4 - core index']
  #allocation1 [shape = 'u32[144,128]{1,0:T(1,128)}', space=vmem, size = 0x12000, scoped, tag = 'internal scratch']
  %s0 = inlined_call_operand.vmem [shape: bf16[2,4,512], index: 0, kind: input, shape index: {}]
  %s1 = inlined_call_operand.vmem [shape: bf16[2,4,512], index: 1, kind: input, shape index: {}]
  %s2 = inlined_call_operand.vmem [shape: bf16[9,8,4], index: 2, kind: input, shape index: {}]
  %s3 = inlined_call_operand.vmem [shape: f32[8,1], index: 3, kind: input, shape index: {}]
  %s4 = inlined_call_operand.hbm [shape: f32[2,8,256], index: 4, kind: output, shape index: {}]
  %s5 = sld [smem:[#allocation0]]
  $region49: #{tpu_custom_call.1} parent=0
    _
  %s7 = ssub.s32 1, %s5
  %s8 = scalar_select 0, %s7, %s5
  $region1: #{tpu_custom_call.1} parent=0
    #allocation2 [shape = 'u8[16384]{0}', space=vmem, size = 0x4000, scoped, tag = 'output window, operand 0']
    #allocation3 [shape = 's32[2]{0}', space=sflag, size = 0x8, scoped, tag = 'scoped memory for tpu_custom_call.1']
    %9 = vsyncpa [#allocation3], 0
    %s10 = scalar_lea.sflag [#allocation3], 1
    %11 = vsyncpa %s10, 0
    loop: start=0, step=1, limit=4
    $region2: #{tpu_custom_call.1} parent=1 // loop_pre_header
      _
    $region3: #{tpu_custom_call.1} parent=1 // loop_header
      %s13 = sphi 0, %s17
      %p14 = scmp.ge.s32.totalorder %s13, 4
      %s20 = sphi 0, %s32
      %s21 = sphi 0, %s28
      %s22 = sphi 0, %s20
      %s23 = sphi 0, %s21
      %s24 = sphi 0, %s22
      %s25 = sphi 0, %s23
      %s37 = sphi 0, %s39
      %s40 = sphi 0, %s37
      %s41 = sphi 0, %s40
      %s57 = sphi 0, %s41
      %s67 = sphi 0, %s69
      %s70 = sphi 0, %s67
      %s71 = sphi 0, %s70
      %s87 = sphi 0, %s71
      %s91 = sphi 0, %s91
      %s93 = sphi 0, %s91
      %s94 = sphi 0, %s93
      %s108 = sphi 0, %s94
      %s112 = sphi 0, %s112
      %s114 = sphi 0, %s112
      %s115 = sphi 0, %s114
      %s129 = sphi 0, %s115
      %s137 = sphi 0, %s139
      %s140 = sphi 0, %s137
      %s141 = sphi 0, %s140
      %s157 = sphi 0, %s141
    $region4: #{tpu_custom_call.1} parent=1 // loop_header_branch
      %16 = sbr.rel (%p14) target = $region8
    $region5: #{tpu_custom_call.1} parent=1 // loop_body
      %s18 = ssub.s32 %s13, 1
      %s19 = ssub.s32 %s13, 2
      %s26 = sadd.s32 1, %s21
      %p27 = scmp.ge.s32.totalorder %s26, 1
      %s28 = scalar_select %p27, 0, %s26
      %s29 = sadd.s32 1, %s20
      %s30 = scalar_select %p27, %s29, %s20
      %p31 = scmp.ge.s32.totalorder %s30, 2
      %s32 = scalar_select %p31, 0, %s30
      %s33 = ssub.s32 %s20, %s32
      %s34 = ssub.s32 %s21, %s28
      %s35 = sor.u32 %s33, %s34
      %p36 = scmp.eq.s32.totalorder %s35, 0
      %s38 = sadd.s32 %s37, 1
      %s39 = scalar_select %p36, %s37, %s38
      %p42 = pneg %p36
      %p43 = scmp.eq.s32.totalorder %s13, 1
      %p44 = por %p42, %p43
      %p45 = scmp.ne.s32.totalorder %s37, %s40
      %p46 = scmp.eq.s32.totalorder %s13, 0
      %p47 = por %p45, %p46
      %p48 = scmp.ne.s32.totalorder %s37, %s40
      %p49 = scmp.eq.s32.totalorder %s18, 1
      %p50 = por %p48, %p49
      %p51 = scmp.ne.s32.totalorder %s40, %s41
      %p52 = scmp.eq.s32.totalorder %s18, 0
      %p53 = por %p51, %p52
      %p54 = scmp.ne.s32.totalorder %s40, %s41
      %p55 = scmp.eq.s32.totalorder %s19, 1
      %p56 = por %p54, %p55
      %p58 = scmp.ne.s32.totalorder %s41, %s57
      %p59 = scmp.eq.s32.totalorder %s19, 0
      %p60 = por %p58, %p59
      %s61 = sadd.s32 %s21, 1
      %s62 = sadd.s32 %s28, 1
      %s63 = ssub.s32 %s20, %s32
      %s64 = ssub.s32 %s61, %s62
      %s65 = sor.u32 %s63, %s64
      %p66 = scmp.eq.s32.totalorder %s65, 0
      %s68 = sadd.s32 %s67, 1
      %s69 = scalar_select %p66, %s67, %s68
      %p72 = pneg %p66
      %p73 = scmp.eq.s32.totalorder %s13, 1
      %p74 = por %p72, %p73
      %p75 = scmp.ne.s32.totalorder %s67, %s70
      %p76 = scmp.eq.s32.totalorder %s13, 0
      %p77 = por %p75, %p76
      %p78 = scmp.ne.s32.totalorder %s67, %s70
      %p79 = scmp.eq.s32.totalorder %s18, 1
      %p80 = por %p78, %p79
      %p81 = scmp.ne.s32.totalorder %s70, %s71
      %p82 = scmp.eq.s32.totalorder %s18, 0
      %p83 = por %p81, %p82
      %p84 = scmp.ne.s32.totalorder %s70, %s71
      %p85 = scmp.eq.s32.totalorder %s19, 1
      %p86 = por %p84, %p85
      %p88 = scmp.ne.s32.totalorder %s71, %s87
      %p89 = scmp.eq.s32.totalorder %s19, 0
      %p90 = por %p88, %p89
      %s92 = sadd.s32 %s91, 1
      %p95 = scmp.eq.s32.totalorder %s13, 1
      %p96 = scmp.ne.s32.totalorder %s91, %s93
      %p97 = scmp.eq.s32.totalorder %s13, 0
      %p98 = por %p96, %p97
      %p99 = scmp.ne.s32.totalorder %s91, %s93
      %p100 = scmp.eq.s32.totalorder %s18, 1
      %p101 = por %p99, %p100
      %p102 = scmp.ne.s32.totalorder %s93, %s94
      %p103 = scmp.eq.s32.totalorder %s18, 0
      %p104 = por %p102, %p103
      %p105 = scmp.ne.s32.totalorder %s93, %s94
      %p106 = scmp.eq.s32.totalorder %s19, 1
      %p107 = por %p105, %p106
      %p109 = scmp.ne.s32.totalorder %s94, %s108
      %p110 = scmp.eq.s32.totalorder %s19, 0
      %p111 = por %p109, %p110
      %s113 = sadd.s32 %s112, 1
      %p116 = scmp.eq.s32.totalorder %s13, 1
      %p117 = scmp.ne.s32.totalorder %s112, %s114
      %p118 = scmp.eq.s32.totalorder %s13, 0
      %p119 = por %p117, %p118
      %p120 = scmp.ne.s32.totalorder %s112, %s114
      %p121 = scmp.eq.s32.totalorder %s18, 1
      %p122 = por %p120, %p121
      %p123 = scmp.ne.s32.totalorder %s114, %s115
      %p124 = scmp.eq.s32.totalorder %s18, 0
      %p125 = por %p123, %p124
      %p126 = scmp.ne.s32.totalorder %s114, %s115
      %p127 = scmp.eq.s32.totalorder %s19, 1
      %p128 = por %p126, %p127
      %p130 = scmp.ne.s32.totalorder %s115, %s129
      %p131 = scmp.eq.s32.totalorder %s19, 0
      %p132 = por %p130, %p131
      %s133 = ssub.s32 %s20, %s32
      %s134 = ssub.s32 %s21, %s28
      %s135 = sor.u32 %s133, %s134
      %p136 = scmp.eq.s32.totalorder %s135, 0
      %s138 = sadd.s32 %s137, 1
      %s139 = scalar_select %p136, %s137, %s138
      %p142 = pneg %p136
      %p143 = scmp.eq.s32.totalorder %s13, 1
      %p144 = por %p142, %p143
      %p145 = scmp.ne.s32.totalorder %s137, %s140
      %p146 = scmp.eq.s32.totalorder %s13, 0
      %p147 = por %p145, %p146
      %p148 = scmp.ne.s32.totalorder %s137, %s140
      %p149 = scmp.eq.s32.totalorder %s18, 1
      %p150 = por %p148, %p149
      %p151 = scmp.ne.s32.totalorder %s140, %s141
      %p152 = scmp.eq.s32.totalorder %s18, 0
      %p153 = por %p151, %p152
      %p154 = scmp.ne.s32.totalorder %s140, %s141
      %p155 = scmp.eq.s32.totalorder %s19, 1
      %p156 = por %p154, %p155
      %p158 = scmp.ne.s32.totalorder %s141, %s157
      %p159 = scmp.eq.s32.totalorder %s19, 0
      %p160 = por %p158, %p159
      %p161 = scmp.le.s32.totalorder 1, %s13
      %p162 = scmp.lt.s32.totalorder %s13, 3
      %p163 = pnand %p161, %p162
      %p164 = pneg %p163
      // Predicated region
      $region9: #{tpu_custom_call.1} parent=5 // pred_check
        _
      $region10: #{tpu_custom_call.1} parent=5 // pred_check_branch
        %166 = sbr.rel (%p163) target = $region12
      $region11: #{tpu_custom_call.1} parent=5 // pred_region
        %s167 = ssub.s32 %s13, 1
        // Predicated region
        $region13: #{tpu_custom_call.1} parent=11 // pred_check
          %p168 = pneg %p104
        $region14: #{tpu_custom_call.1} parent=11 // pred_check_branch
          %170 = sbr.rel (%p168) target = $region16
        $region15: #{tpu_custom_call.1} parent=11 // pred_region
          _
        $region16: #{tpu_custom_call.1} parent=11 // pred_fallthru
          _
        // Predicated region
        $region17: #{tpu_custom_call.1} parent=11 // pred_check
          %p171 = pneg %p125
        $region18: #{tpu_custom_call.1} parent=11 // pred_check_branch
          %173 = sbr.rel (%p171) target = $region20
        $region19: #{tpu_custom_call.1} parent=11 // pred_region
          _
        $region20: #{tpu_custom_call.1} parent=11 // pred_fallthru
          _
      $region12: #{tpu_custom_call.1} parent=5 // pred_fallthru
        _
      %p174 = scmp.lt.s32.totalorder %s13, 2
      // Predicated region
      $region21: #{tpu_custom_call.1} parent=5 // pred_check
        %p175 = pneg %p174
      $region22: #{tpu_custom_call.1} parent=5 // pred_check_branch
        %177 = sbr.rel (%p175) target = $region24
      $region23: #{tpu_custom_call.1} parent=5 // pred_region
        // Predicated region
        $region25: #{tpu_custom_call.1} parent=23 // pred_check
          %p178 = pneg %p47
        $region26: #{tpu_custom_call.1} parent=23 // pred_check_branch
          %180 = sbr.rel (%p178) target = $region28
        $region27: #{tpu_custom_call.1} parent=23 // pred_region
          %s181 = smul.u32 2, %s21
          %p182 = scmp.lt.s32.totalorder %s20, 1
          %s183 = scalar_select %p182, %s20, 1
          %p184 = scmp.lt.s32.totalorder %s181, 3
          %s185 = scalar_select %p184, %s181, 3
          %s186 = smul.addr %s183, 4
          %s187 = sadd.s32 %s185, %s186
          %s188 = smul.addr %s187, 2
          %s189 = scalar_lea.vmem %s0, %s188
          %s190 = smul.u32 2, %s21
        $region28: #{tpu_custom_call.1} parent=23 // pred_fallthru
          _
        // Predicated region
        $region29: #{tpu_custom_call.1} parent=23 // pred_check
          %p191 = pneg %p77
        $region30: #{tpu_custom_call.1} parent=23 // pred_check_branch
          %193 = sbr.rel (%p191) target = $region32
        $region31: #{tpu_custom_call.1} parent=23 // pred_region
          %s194 = sadd.s32 %s21, 1
          %s195 = smul.u32 2, %s194
          %p196 = scmp.lt.s32.totalorder %s20, 1
          %s197 = scalar_select %p196, %s20, 1
          %p198 = scmp.lt.s32.totalorder %s195, 3
          %s199 = scalar_select %p198, %s195, 3
          %s200 = smul.addr %s197, 4
          %s201 = sadd.s32 %s199, %s200
          %s202 = smul.addr %s201, 2
          %s203 = scalar_lea.vmem %s1, %s202
          %s204 = sadd.s32 %s21, 1
          %s205 = smul.u32 2, %s204
        $region32: #{tpu_custom_call.1} parent=23 // pred_fallthru
          _
      $region24: #{tpu_custom_call.1} parent=5 // pred_fallthru
        _
      %p206 = scmp.le.s32.totalorder 1, %s13
      %p207 = scmp.lt.s32.totalorder %s13, 3
      %p208 = pnand %p206, %p207
      %p209 = pneg %p208
      // Predicated region
      $region33: #{tpu_custom_call.1} parent=5 // pred_check
        _
      $region34: #{tpu_custom_call.1} parent=5 // pred_check_branch
        %211 = sbr.rel (%p208) target = $region36
      $region35: #{tpu_custom_call.1} parent=5 // pred_region
        %s212 = ssub.s32 %s13, 1
        %s213 = smul.u32 2, %s23
        %p214 = scmp.lt.s32.totalorder %s22, 1
        %s215 = scalar_select %p214, %s22, 1
        %p216 = scmp.lt.s32.totalorder %s213, 3
        %s217 = scalar_select %p216, %s213, 3
        %s218 = smul.addr %s215, 4
        %s219 = sadd.s32 %s217, %s218
        %s220 = smul.addr %s219, 2
        %s221 = scalar_lea.vmem %s0, %s220
        %p222 = pneg %p53
        %p223 = pneg %p50
        %s224 = sadd.s32 %s23, 1
        %s225 = smul.u32 2, %s224
        %p226 = scmp.lt.s32.totalorder %s22, 1
        %s227 = scalar_select %p226, %s22, 1
        %p228 = scmp.lt.s32.totalorder %s225, 3
        %s229 = scalar_select %p228, %s225, 3
        %s230 = smul.addr %s227, 4
        %s231 = sadd.s32 %s229, %s230
        %s232 = smul.addr %s231, 2
        %s233 = scalar_lea.vmem %s1, %s232
        %p234 = pneg %p83
        %p235 = pneg %p80
        %p236 = pneg %p104
        %p237 = pneg %p101
        %p238 = pneg %p125
        %p239 = pneg %p122
        %p240 = pneg %p153
        %p241 = pneg %p150
        %s242 = sand.u32 %s140, 1
        %s243 = scalar_lea.sflag [#allocation3], %s242
        %s244 = sand.u32 %s140, 1
        %s245 = smul.addr %s244, 16
        %s246 = scalar_lea.vmem [#allocation2], %s245
        %s247 = smul.u32 2, %s23
        %p248 = scmp.lt.s32.totalorder %s22, 1
        %s249 = scalar_select %p248, %s22, 1
        %p250 = scmp.lt.s32.totalorder %s247, 3
        %s251 = scalar_select %p250, %s247, 3
        %s252 = smul.addr %s249, 4
        %s253 = sadd.s32 %s251, %s252
        %s254 = smul.addr %s253, 2
        %s255 = scalar_lea.vmem %s0, %s254
        %s256 = smul.u32 2, %s23
        %s257 = sadd.s32 %s23, 1
        %s258 = smul.u32 2, %s257
        %p259 = scmp.lt.s32.totalorder %s22, 1
        %s260 = scalar_select %p259, %s22, 1
        %p261 = scmp.lt.s32.totalorder %s258, 3
        %s262 = scalar_select %p261, %s258, 3
        %s263 = smul.addr %s260, 4
        %s264 = sadd.s32 %s262, %s263
        %s265 = smul.addr %s264, 2
        %s266 = scalar_lea.vmem %s1, %s265
        %s267 = sadd.s32 %s23, 1
        %s268 = smul.u32 2, %s267
        %s269 = smul.u32 2, %s23
        %v271 = vld [vmem:[%s255] sm:$0xf]
        %v272 = vld [vmem:[%s266] sm:$0xf]
        %v275 = vunpack.c.l.s4 1983009808
        %v276 = vunpack.c.0.s8 %v275
        %v277 = vlaneseq
        %v278 = vshrl.u32 %v277, 7
        %v279 = vsub.s32 %v276, %v278
        %v280 = vrot.slane %v271, %v279
        %v281 = vcombine.high %v280, %v280
        %v284 = vunpack.c.l.s4 1983009808
        %v285 = vunpack.c.0.s8 %v284
        %v286 = vlaneseq
        %v287 = vshrl.u32 %v286, 7
        %v288 = vsub.s32 %v285, %v287
        %v289 = vrot.slane %v272, %v288
        %v290 = vld [vmem:[%s2] sm:$0xf]
        %s291 = scalar_lea.vmem %s2, 4
        %v292 = vld [vmem:[%s291] sm:$0xf]
        %293 = vrot.lane.b32.xlu0 %v280, 127
        %v294 = vpop.permute.xlu0 %293
        %295 = vrot.lane.b32.xlu0 %v281, 127
        %v296 = vpop.permute.xlu0 %295
        %297 = vrot.lane.b32.xlu0 %v289, 127
        %v298 = vpop.permute.xlu0 %297
        %vm299 = vcmask 1039360
        %v300 = vsel %vm299, %v294, %v296
        %v301 = vsel %vm299, %v296, %v298
        %vm302 = vcmask 31744
        %v304 = vsel %vm302, %v292, 0
        %vm306 = vcmask 1041408
        %v308 = vsel %vm306, %v300, 0
        %v311 = vsel %vm306, %v301, 0
        %313 = vmatprep.subr.bf16.mxu0 %v311
        %314 = vmatpush1.bf16.msra.mxu0 %v308
        %315 = vmatprep.subr.bf16.mxu0 0
        %316 = vmatpush1.bf16.msra.mxu0 0
        %317 = vmatprep.subr.bf16.mxu0 0
        %318 = vmatpush1.bf16.msra.mxu0 0
        %319 = vmatprep.subr.bf16.mxu0 0
        %320 = vmatpush1.bf16.msra.mxu0 0
        %321 = vmatprep.subr.bf16.mxu0 0
        %322 = vmatpush1.bf16.msra.mxu0 0
        %323 = vmatprep.subr.bf16.mxu0 0
        %324 = vmatpush1.bf16.msra.mxu0 0
        %325 = vmatprep.subr.bf16.mxu0 0
        %326 = vmatpush1.bf16.msra.mxu0 0
        %327 = vmatprep.subr.bf16.mxu0 0
        %328 = vmatpush1.bf16.msra.mxu0 0
        %329 = vmatprep.subr.bf16.mxu0 0
        %330 = vmatpush1.bf16.msra.mxu0 0
        %331 = vmatprep.subr.bf16.mxu0 0
        %332 = vmatpush1.bf16.msra.mxu0 0
        %333 = vmatprep.subr.bf16.mxu0 0
        %334 = vmatpush1.bf16.msra.mxu0 0
        %335 = vmatprep.subr.bf16.mxu0 0
        %336 = vmatpush1.bf16.msra.mxu0 0
        %337 = vmatprep.subr.bf16.mxu0 0
        %338 = vmatpush1.bf16.msra.mxu0 0
        %339 = vmatprep.subr.bf16.mxu0 0
        %340 = vmatpush1.bf16.msra.mxu0 0
        %341 = vmatprep.subr.bf16.mxu0 0
        %342 = vmatpush1.bf16.msra.mxu0 0
        %343 = vmatprep.subr.bf16.mxu0 0
        %344 = vmatpush1.bf16.msra.mxu0 0
        %345 = vmatprep.mubr.bf16.mxu0 0
        %346 = vmatmul.mubr.bf16.gmra.mrb[0].mxu0 %v304
        %v347 = vpop.f32.mrb[0].mxu0
        %v348 = vadd.f32 0.0, %v347
        %v349 = vpop.f32.mrb[0].mxu0
        %v350 = vadd.f32 0.0, %v349
        %v351 = vpop.f32.mrb[0].mxu0
        %v352 = vpop.f32.mrb[0].mxu0
        %353 = vdwg.mxu0
        %v355 = vsel %vm302, %v290, 0
        %v358 = vsel %vm306, %v280, 0
        %v361 = vsel %vm306, %v281, 0
        %363 = vmatprep.subr.bf16.mxu0 %v361
        %364 = vmatpush1.bf16.msra.mxu0 %v358
        %365 = vmatprep.subr.bf16.mxu0 0
        %366 = vmatpush1.bf16.msra.mxu0 0
        %367 = vmatprep.subr.bf16.mxu0 0
        %368 = vmatpush1.bf16.msra.mxu0 0
        %369 = vmatprep.subr.bf16.mxu0 0
        %370 = vmatpush1.bf16.msra.mxu0 0
        %371 = vmatprep.subr.bf16.mxu0 0
        %372 = vmatpush1.bf16.msra.mxu0 0
        %373 = vmatprep.subr.bf16.mxu0 0
        %374 = vmatpush1.bf16.msra.mxu0 0
        %375 = vmatprep.subr.bf16.mxu0 0
        %376 = vmatpush1.bf16.msra.mxu0 0
        %377 = vmatprep.subr.bf16.mxu0 0
        %378 = vmatpush1.bf16.msra.mxu0 0
        %379 = vmatprep.subr.bf16.mxu0 0
        %380 = vmatpush1.bf16.msra.mxu0 0
        %381 = vmatprep.subr.bf16.mxu0 0
        %382 = vmatpush1.bf16.msra.mxu0 0
        %383 = vmatprep.subr.bf16.mxu0 0
        %384 = vmatpush1.bf16.msra.mxu0 0
        %385 = vmatprep.subr.bf16.mxu0 0
        %386 = vmatpush1.bf16.msra.mxu0 0
        %387 = vmatprep.subr.bf16.mxu0 0
        %388 = vmatpush1.bf16.msra.mxu0 0
        %389 = vmatprep.subr.bf16.mxu0 0
        %390 = vmatpush1.bf16.msra.mxu0 0
        %391 = vmatprep.subr.bf16.mxu0 0
        %392 = vmatpush1.bf16.msra.mxu0 0
        %393 = vmatprep.subr.bf16.mxu0 0
        %394 = vmatpush1.bf16.msra.mxu0 0
        %395 = vmatprep.mubr.bf16.mxu0 0
        %396 = vmatmul.mubr.bf16.gmra.mrb[0].mxu0 %v355
        %v397 = vpop.f32.mrb[0].mxu0
        %v398 = vadd.f32 %v348, %v397
        %v399 = vpop.f32.mrb[0].mxu0
        %v400 = vadd.f32 %v350, %v399
        %v401 = vpop.f32.mrb[0].mxu0
        %v402 = vpop.f32.mrb[0].mxu0
        %403 = vdwg.mxu0
        %s404 = scalar_lea.vmem %s2, 8
        %v405 = vld [vmem:[%s404] sm:$0xf]
        %406 = vrot.lane.b32.xlu0 %v280, 126
        %v407 = vpop.permute.xlu0 %406
        %408 = vrot.lane.b32.xlu0 %v281, 126
        %v409 = vpop.permute.xlu0 %408
        %410 = vrot.lane.b32.xlu0 %v289, 126
        %v411 = vpop.permute.xlu0 %410
        %vm412 = vcmask 1031168
        %v413 = vsel %vm412, %v407, %v409
        %v414 = vsel %vm412, %v409, %v411
        %v416 = vsel %vm302, %v405, 0
        %v419 = vsel %vm306, %v413, 0
        %v422 = vsel %vm306, %v414, 0
        %424 = vmatprep.subr.bf16.mxu0 %v422
        %425 = vmatpush1.bf16.msra.mxu0 %v419
        %426 = vmatprep.subr.bf16.mxu0 0
        %427 = vmatpush1.bf16.msra.mxu0 0
        %428 = vmatprep.subr.bf16.mxu0 0
        %429 = vmatpush1.bf16.msra.mxu0 0
        %430 = vmatprep.subr.bf16.mxu0 0
        %431 = vmatpush1.bf16.msra.mxu0 0
        %432 = vmatprep.subr.bf16.mxu0 0
        %433 = vmatpush1.bf16.msra.mxu0 0
        %434 = vmatprep.subr.bf16.mxu0 0
        %435 = vmatpush1.bf16.msra.mxu0 0
        %436 = vmatprep.subr.bf16.mxu0 0
        %437 = vmatpush1.bf16.msra.mxu0 0
        %438 = vmatprep.subr.bf16.mxu0 0
        %439 = vmatpush1.bf16.msra.mxu0 0
        %440 = vmatprep.subr.bf16.mxu0 0
        %441 = vmatpush1.bf16.msra.mxu0 0
        %442 = vmatprep.subr.bf16.mxu0 0
        %443 = vmatpush1.bf16.msra.mxu0 0
        %444 = vmatprep.subr.bf16.mxu0 0
        %445 = vmatpush1.bf16.msra.mxu0 0
        %446 = vmatprep.subr.bf16.mxu0 0
        %447 = vmatpush1.bf16.msra.mxu0 0
        %448 = vmatprep.subr.bf16.mxu0 0
        %449 = vmatpush1.bf16.msra.mxu0 0
        %450 = vmatprep.subr.bf16.mxu0 0
        %451 = vmatpush1.bf16.msra.mxu0 0
        %452 = vmatprep.subr.bf16.mxu0 0
        %453 = vmatpush1.bf16.msra.mxu0 0
        %454 = vmatprep.subr.bf16.mxu0 0
        %455 = vmatpush1.bf16.msra.mxu0 0
        %456 = vmatprep.mubr.bf16.mxu0 0
        %457 = vmatmul.mubr.bf16.gmra.mrb[0].mxu0 %v416
        %v458 = vpop.f32.mrb[0].mxu0
        %v459 = vadd.f32 0.0, %v458
        %v460 = vpop.f32.mrb[0].mxu0
        %v461 = vadd.f32 0.0, %v460
        %v462 = vpop.f32.mrb[0].mxu0
        %v463 = vpop.f32.mrb[0].mxu0
        %464 = vdwg.mxu0
        %v465 = vadd.f32 %v398, %v459
        %v466 = vadd.f32 %v400, %v461
        %s467 = scalar_lea.vmem %s2, 12
        %v468 = vld [vmem:[%s467] sm:$0xf]
        %469 = vrot.lane.b32.xlu0 %v280, 112
        %v470 = vpop.permute.xlu0 %469
        %471 = vrot.lane.b32.xlu0 %v281, 112
        %v472 = vpop.permute.xlu0 %471
        %473 = vrot.lane.b32.xlu0 %v289, 112
        %v474 = vpop.permute.xlu0 %473
        %vm475 = vcmask 916480
        %v476 = vsel %vm475, %v470, %v472
        %v477 = vsel %vm475, %v472, %v474
        %v479 = vsel %vm302, %v468, 0
        %v482 = vsel %vm306, %v476, 0
        %v485 = vsel %vm306, %v477, 0
        %487 = vmatprep.subr.bf16.mxu0 %v485
        %488 = vmatpush1.bf16.msra.mxu0 %v482
        %489 = vmatprep.subr.bf16.mxu0 0
        %490 = vmatpush1.bf16.msra.mxu0 0
        %491 = vmatprep.subr.bf16.mxu0 0
        %492 = vmatpush1.bf16.msra.mxu0 0
        %493 = vmatprep.subr.bf16.mxu0 0
        %494 = vmatpush1.bf16.msra.mxu0 0
        %495 = vmatprep.subr.bf16.mxu0 0
        %496 = vmatpush1.bf16.msra.mxu0 0
        %497 = vmatprep.subr.bf16.mxu0 0
        %498 = vmatpush1.bf16.msra.mxu0 0
        %499 = vmatprep.subr.bf16.mxu0 0
        %500 = vmatpush1.bf16.msra.mxu0 0
        %501 = vmatprep.subr.bf16.mxu0 0
        %502 = vmatpush1.bf16.msra.mxu0 0
        %503 = vmatprep.subr.bf16.mxu0 0
        %504 = vmatpush1.bf16.msra.mxu0 0
        %505 = vmatprep.subr.bf16.mxu0 0
        %506 = vmatpush1.bf16.msra.mxu0 0
        %507 = vmatprep.subr.bf16.mxu0 0
        %508 = vmatpush1.bf16.msra.mxu0 0
        %509 = vmatprep.subr.bf16.mxu0 0
        %510 = vmatpush1.bf16.msra.mxu0 0
        %511 = vmatprep.subr.bf16.mxu0 0
        %512 = vmatpush1.bf16.msra.mxu0 0
        %513 = vmatprep.subr.bf16.mxu0 0
        %514 = vmatpush1.bf16.msra.mxu0 0
        %515 = vmatprep.subr.bf16.mxu0 0
        %516 = vmatpush1.bf16.msra.mxu0 0
        %517 = vmatprep.subr.bf16.mxu0 0
        %518 = vmatpush1.bf16.msra.mxu0 0
        %519 = vmatprep.mubr.bf16.mxu0 0
        %520 = vmatmul.mubr.bf16.gmra.mrb[0].mxu0 %v479
        %v521 = vpop.f32.mrb[0].mxu0
        %v522 = vadd.f32 0.0, %v521
        %v523 = vpop.f32.mrb[0].mxu0
        %v524 = vadd.f32 0.0, %v523
        %v525 = vpop.f32.mrb[0].mxu0
        %v526 = vpop.f32.mrb[0].mxu0
        %527 = vdwg.mxu0
        %v528 = vadd.f32 %v465, %v522
        %v529 = vadd.f32 %v466, %v524
        %s530 = scalar_lea.vmem %s2, 16
        %v531 = vld [vmem:[%s530] sm:$0xf]
        %532 = vrot.lane.b32.xlu0 %v280, 111
        %v533 = vpop.permute.xlu0 %532
        %534 = vrot.lane.b32.xlu0 %v281, 111
        %v535 = vpop.permute.xlu0 %534
        %536 = vrot.lane.b32.xlu0 %v289, 111
        %v537 = vpop.permute.xlu0 %536
        %vm538 = vcmask 908288
        %v539 = vsel %vm538, %v533, %v535
        %v540 = vsel %vm538, %v535, %v537
        %v542 = vsel %vm302, %v531, 0
        %v545 = vsel %vm306, %v539, 0
        %v548 = vsel %vm306, %v540, 0
        %550 = vmatprep.subr.bf16.mxu0 %v548
        %551 = vmatpush1.bf16.msra.mxu0 %v545
        %552 = vmatprep.subr.bf16.mxu0 0
        %553 = vmatpush1.bf16.msra.mxu0 0
        %554 = vmatprep.subr.bf16.mxu0 0
        %555 = vmatpush1.bf16.msra.mxu0 0
        %556 = vmatprep.subr.bf16.mxu0 0
        %557 = vmatpush1.bf16.msra.mxu0 0
        %558 = vmatprep.subr.bf16.mxu0 0
        %559 = vmatpush1.bf16.msra.mxu0 0
        %560 = vmatprep.subr.bf16.mxu0 0
        %561 = vmatpush1.bf16.msra.mxu0 0
        %562 = vmatprep.subr.bf16.mxu0 0
        %563 = vmatpush1.bf16.msra.mxu0 0
        %564 = vmatprep.subr.bf16.mxu0 0
        %565 = vmatpush1.bf16.msra.mxu0 0
        %566 = vmatprep.subr.bf16.mxu0 0
        %567 = vmatpush1.bf16.msra.mxu0 0
        %568 = vmatprep.subr.bf16.mxu0 0
        %569 = vmatpush1.bf16.msra.mxu0 0
        %570 = vmatprep.subr.bf16.mxu0 0
        %571 = vmatpush1.bf16.msra.mxu0 0
        %572 = vmatprep.subr.bf16.mxu0 0
        %573 = vmatpush1.bf16.msra.mxu0 0
        %574 = vmatprep.subr.bf16.mxu0 0
        %575 = vmatpush1.bf16.msra.mxu0 0
        %576 = vmatprep.subr.bf16.mxu0 0
        %577 = vmatpush1.bf16.msra.mxu0 0
        %578 = vmatprep.subr.bf16.mxu0 0
        %579 = vmatpush1.bf16.msra.mxu0 0
        %580 = vmatprep.subr.bf16.mxu0 0
        %581 = vmatpush1.bf16.msra.mxu0 0
        %582 = vmatprep.mubr.bf16.mxu0 0
        %583 = vmatmul.mubr.bf16.gmra.mrb[0].mxu0 %v542
        %v584 = vpop.f32.mrb[0].mxu0
        %v585 = vadd.f32 0.0, %v584
        %v586 = vpop.f32.mrb[0].mxu0
        %v587 = vadd.f32 0.0, %v586
        %v588 = vpop.f32.mrb[0].mxu0
        %v589 = vpop.f32.mrb[0].mxu0
        %590 = vdwg.mxu0
        %v591 = vadd.f32 %v528, %v585
        %v592 = vadd.f32 %v529, %v587
        %s593 = scalar_lea.vmem %s2, 20
        %v594 = vld [vmem:[%s593] sm:$0xf]
        %595 = vrot.lane.b32.xlu0 %v280, 110
        %v596 = vpop.permute.xlu0 %595
        %597 = vrot.lane.b32.xlu0 %v281, 110
        %v598 = vpop.permute.xlu0 %597
        %599 = vrot.lane.b32.xlu0 %v289, 110
        %v600 = vpop.permute.xlu0 %599
        %vm601 = vcmask 900096
        %v602 = vsel %vm601, %v596, %v598
        %v603 = vsel %vm601, %v598, %v600
        %v605 = vsel %vm302, %v594, 0
        %v608 = vsel %vm306, %v602, 0
        %v611 = vsel %vm306, %v603, 0
        %613 = vmatprep.subr.bf16.mxu0 %v611
        %614 = vmatpush1.bf16.msra.mxu0 %v608
        %615 = vmatprep.subr.bf16.mxu0 0
        %616 = vmatpush1.bf16.msra.mxu0 0
        %617 = vmatprep.subr.bf16.mxu0 0
        %618 = vmatpush1.bf16.msra.mxu0 0
        %619 = vmatprep.subr.bf16.mxu0 0
        %620 = vmatpush1.bf16.msra.mxu0 0
        %621 = vmatprep.subr.bf16.mxu0 0
        %622 = vmatpush1.bf16.msra.mxu0 0
        %623 = vmatprep.subr.bf16.mxu0 0
        %624 = vmatpush1.bf16.msra.mxu0 0
        %625 = vmatprep.subr.bf16.mxu0 0
        %626 = vmatpush1.bf16.msra.mxu0 0
        %627 = vmatprep.subr.bf16.mxu0 0
        %628 = vmatpush1.bf16.msra.mxu0 0
        %629 = vmatprep.subr.bf16.mxu0 0
        %630 = vmatpush1.bf16.msra.mxu0 0
        %631 = vmatprep.subr.bf16.mxu0 0
        %632 = vmatpush1.bf16.msra.mxu0 0
        %633 = vmatprep.subr.bf16.mxu0 0
        %634 = vmatpush1.bf16.msra.mxu0 0
        %635 = vmatprep.subr.bf16.mxu0 0
        %636 = vmatpush1.bf16.msra.mxu0 0
        %637 = vmatprep.subr.bf16.mxu0 0
        %638 = vmatpush1.bf16.msra.mxu0 0
        %639 = vmatprep.subr.bf16.mxu0 0
        %640 = vmatpush1.bf16.msra.mxu0 0
        %641 = vmatprep.subr.bf16.mxu0 0
        %642 = vmatpush1.bf16.msra.mxu0 0
        %643 = vmatprep.subr.bf16.mxu0 0
        %644 = vmatpush1.bf16.msra.mxu0 0
        %645 = vmatprep.mubr.bf16.mxu0 0
        %646 = vmatmul.mubr.bf16.gmra.mrb[0].mxu0 %v605
        %v647 = vpop.f32.mrb[0].mxu0
        %v648 = vadd.f32 0.0, %v647
        %v649 = vpop.f32.mrb[0].mxu0
        %v650 = vadd.f32 0.0, %v649
        %v651 = vpop.f32.mrb[0].mxu0
        %v652 = vpop.f32.mrb[0].mxu0
        %653 = vdwg.mxu0
        %v654 = vadd.f32 %v591, %v648
        %v655 = vadd.f32 %v592, %v650
        %s656 = scalar_lea.vmem %s2, 24
        %v657 = vld [vmem:[%s656] sm:$0xf]
        %658 = vrot.lane.b32.xlu0 %v280, 96
        %v659 = vpop.permute.xlu0 %658
        %660 = vrot.lane.b32.xlu0 %v281, 96
        %v661 = vpop.permute.xlu0 %660
        %662 = vrot.lane.b32.xlu0 %v289, 96
        %v663 = vpop.permute.xlu0 %662
        %vm664 = vcmask 785408
        %v665 = vsel %vm664, %v659, %v661
        %v666 = vsel %vm664, %v661, %v663
        %v668 = vsel %vm302, %v657, 0
        %v671 = vsel %vm306, %v665, 0
        %v674 = vsel %vm306, %v666, 0
        %676 = vmatprep.subr.bf16.mxu0 %v674
        %677 = vmatpush1.bf16.msra.mxu0 %v671
        %678 = vmatprep.subr.bf16.mxu0 0
        %679 = vmatpush1.bf16.msra.mxu0 0
        %680 = vmatprep.subr.bf16.mxu0 0
        %681 = vmatpush1.bf16.msra.mxu0 0
        %682 = vmatprep.subr.bf16.mxu0 0
        %683 = vmatpush1.bf16.msra.mxu0 0
        %684 = vmatprep.subr.bf16.mxu0 0
        %685 = vmatpush1.bf16.msra.mxu0 0
        %686 = vmatprep.subr.bf16.mxu0 0
        %687 = vmatpush1.bf16.msra.mxu0 0
        %688 = vmatprep.subr.bf16.mxu0 0
        %689 = vmatpush1.bf16.msra.mxu0 0
        %690 = vmatprep.subr.bf16.mxu0 0
        %691 = vmatpush1.bf16.msra.mxu0 0
        %692 = vmatprep.subr.bf16.mxu0 0
        %693 = vmatpush1.bf16.msra.mxu0 0
        %694 = vmatprep.subr.bf16.mxu0 0
        %695 = vmatpush1.bf16.msra.mxu0 0
        %696 = vmatprep.subr.bf16.mxu0 0
        %697 = vmatpush1.bf16.msra.mxu0 0
        %698 = vmatprep.subr.bf16.mxu0 0
        %699 = vmatpush1.bf16.msra.mxu0 0
        %700 = vmatprep.subr.bf16.mxu0 0
        %701 = vmatpush1.bf16.msra.mxu0 0
        %702 = vmatprep.subr.bf16.mxu0 0
        %703 = vmatpush1.bf16.msra.mxu0 0
        %704 = vmatprep.subr.bf16.mxu0 0
        %705 = vmatpush1.bf16.msra.mxu0 0
        %706 = vmatprep.subr.bf16.mxu0 0
        %707 = vmatpush1.bf16.msra.mxu0 0
        %708 = vmatprep.mubr.bf16.mxu0 0
        %709 = vmatmul.mubr.bf16.gmra.mrb[0].mxu0 %v668
        %v710 = vpop.f32.mrb[0].mxu0
        %v711 = vadd.f32 0.0, %v710
        %v712 = vpop.f32.mrb[0].mxu0
        %v713 = vadd.f32 0.0, %v712
        %v714 = vpop.f32.mrb[0].mxu0
        %v715 = vpop.f32.mrb[0].mxu0
        %716 = vdwg.mxu0
        %v717 = vadd.f32 %v654, %v711
        %v718 = vadd.f32 %v655, %v713
        %s719 = scalar_lea.vmem %s2, 28
        %v720 = vld [vmem:[%s719] sm:$0xf]
        %721 = vrot.lane.b32.xlu0 %v280, 95
        %v722 = vpop.permute.xlu0 %721
        %723 = vrot.lane.b32.xlu0 %v281, 95
        %v724 = vpop.permute.xlu0 %723
        %725 = vrot.lane.b32.xlu0 %v289, 95
        %v726 = vpop.permute.xlu0 %725
        %vm727 = vcmask 777216
        %v728 = vsel %vm727, %v722, %v724
        %v729 = vsel %vm727, %v724, %v726
        %v731 = vsel %vm302, %v720, 0
        %v734 = vsel %vm306, %v728, 0
        %v737 = vsel %vm306, %v729, 0
        %739 = vmatprep.subr.bf16.mxu0 %v737
        %740 = vmatpush1.bf16.msra.mxu0 %v734
        %741 = vmatprep.subr.bf16.mxu0 0
        %742 = vmatpush1.bf16.msra.mxu0 0
        %743 = vmatprep.subr.bf16.mxu0 0
        %744 = vmatpush1.bf16.msra.mxu0 0
        %745 = vmatprep.subr.bf16.mxu0 0
        %746 = vmatpush1.bf16.msra.mxu0 0
        %747 = vmatprep.subr.bf16.mxu0 0
        %748 = vmatpush1.bf16.msra.mxu0 0
        %749 = vmatprep.subr.bf16.mxu0 0
        %750 = vmatpush1.bf16.msra.mxu0 0
        %751 = vmatprep.subr.bf16.mxu0 0
        %752 = vmatpush1.bf16.msra.mxu0 0
        %753 = vmatprep.subr.bf16.mxu0 0
        %754 = vmatpush1.bf16.msra.mxu0 0
        %755 = vmatprep.subr.bf16.mxu0 0
        %756 = vmatpush1.bf16.msra.mxu0 0
        %757 = vmatprep.subr.bf16.mxu0 0
        %758 = vmatpush1.bf16.msra.mxu0 0
        %759 = vmatprep.subr.bf16.mxu0 0
        %760 = vmatpush1.bf16.msra.mxu0 0
        %761 = vmatprep.subr.bf16.mxu0 0
        %762 = vmatpush1.bf16.msra.mxu0 0
        %763 = vmatprep.subr.bf16.mxu0 0
        %764 = vmatpush1.bf16.msra.mxu0 0
        %765 = vmatprep.subr.bf16.mxu0 0
        %766 = vmatpush1.bf16.msra.mxu0 0
        %767 = vmatprep.subr.bf16.mxu0 0
        %768 = vmatpush1.bf16.msra.mxu0 0
        %769 = vmatprep.subr.bf16.mxu0 0
        %770 = vmatpush1.bf16.msra.mxu0 0
        %771 = vmatprep.mubr.bf16.mxu0 0
        %772 = vmatmul.mubr.bf16.gmra.mrb[0].mxu0 %v731
        %v773 = vpop.f32.mrb[0].mxu0
        %v774 = vadd.f32 0.0, %v773
        %v775 = vpop.f32.mrb[0].mxu0
        %v776 = vadd.f32 0.0, %v775
        %v777 = vpop.f32.mrb[0].mxu0
        %v778 = vpop.f32.mrb[0].mxu0
        %779 = vdwg.mxu0
        %v780 = vadd.f32 %v717, %v774
        %v781 = vadd.f32 %v718, %v776
        %s782 = scalar_lea.vmem %s2, 32
        %v783 = vld [vmem:[%s782] sm:$0xf]
        %784 = vrot.lane.b32.xlu0 %v280, 94
        %v785 = vpop.permute.xlu0 %784
        %786 = vrot.lane.b32.xlu0 %v281, 94
        %v787 = vpop.permute.xlu0 %786
        %788 = vrot.lane.b32.xlu0 %v289, 94
        %v789 = vpop.permute.xlu0 %788
        %vm790 = vcmask 769024
        %v791 = vsel %vm790, %v785, %v787
        %v792 = vsel %vm790, %v787, %v789
        %v794 = vsel %vm302, %v783, 0
        %v797 = vsel %vm306, %v791, 0
        %v800 = vsel %vm306, %v792, 0
        %802 = vmatprep.subr.bf16.mxu0 %v800
        %803 = vmatpush1.bf16.msra.mxu0 %v797
        %804 = vmatprep.subr.bf16.mxu0 0
        %805 = vmatpush1.bf16.msra.mxu0 0
        %806 = vmatprep.subr.bf16.mxu0 0
        %807 = vmatpush1.bf16.msra.mxu0 0
        %808 = vmatprep.subr.bf16.mxu0 0
        %809 = vmatpush1.bf16.msra.mxu0 0
        %810 = vmatprep.subr.bf16.mxu0 0
        %811 = vmatpush1.bf16.msra.mxu0 0
        %812 = vmatprep.subr.bf16.mxu0 0
        %813 = vmatpush1.bf16.msra.mxu0 0
        %814 = vmatprep.subr.bf16.mxu0 0
        %815 = vmatpush1.bf16.msra.mxu0 0
        %816 = vmatprep.subr.bf16.mxu0 0
        %817 = vmatpush1.bf16.msra.mxu0 0
        %818 = vmatprep.subr.bf16.mxu0 0
        %819 = vmatpush1.bf16.msra.mxu0 0
        %820 = vmatprep.subr.bf16.mxu0 0
        %821 = vmatpush1.bf16.msra.mxu0 0
        %822 = vmatprep.subr.bf16.mxu0 0
        %823 = vmatpush1.bf16.msra.mxu0 0
        %824 = vmatprep.subr.bf16.mxu0 0
        %825 = vmatpush1.bf16.msra.mxu0 0
        %826 = vmatprep.subr.bf16.mxu0 0
        %827 = vmatpush1.bf16.msra.mxu0 0
        %828 = vmatprep.subr.bf16.mxu0 0
        %829 = vmatpush1.bf16.msra.mxu0 0
        %830 = vmatprep.subr.bf16.mxu0 0
        %831 = vmatpush1.bf16.msra.mxu0 0
        %832 = vmatprep.subr.bf16.mxu0 0
        %833 = vmatpush1.bf16.msra.mxu0 0
        %834 = vmatprep.mubr.bf16.mxu0 0
        %835 = vmatmul.mubr.bf16.gmra.mrb[0].mxu0 %v794
        %v836 = vpop.f32.mrb[0].mxu0
        %v837 = vadd.f32 0.0, %v836
        %v838 = vpop.f32.mrb[0].mxu0
        %v839 = vadd.f32 0.0, %v838
        %v840 = vpop.f32.mrb[0].mxu0
        %v841 = vpop.f32.mrb[0].mxu0
        %842 = vdwg.mxu0
        %v843 = vadd.f32 %v780, %v837
        %v844 = vadd.f32 %v781, %v839
        %v845 = vld [vmem:[%s3] sm:$0xff]
        %847 = vset.pattern.permute.xlu0 0
        %848 = vperm.xlu0 %847, %v845
        %v849 = vpop.permute.xlu0 %848
        %v851 = vadd.f32 %v843, %v849
        %v852 = vadd.f32 %v844, %v849
        %v853 = vmax.f32 %v851, 0.0
        %v854 = vmax.f32 %v852, 0.0
        %855 = vst [vmem:[%s246] sm:$0xff] %v853
        %856 = vst [vmem:[%s246 + $0x8] sm:$0xff] %v854
        %s857 = sand.u32 %s140, 1
        %s858 = scalar_lea.sflag [#allocation3], %s857
        %s859 = sand.u32 %s140, 1
        %s860 = smul.addr %s859, 16
        %s861 = scalar_lea.vmem [#allocation2], %s860
        // Predicated region
        $region37: #{tpu_custom_call.1} parent=35 // pred_check
          %p862 = pneg %p150
        $region38: #{tpu_custom_call.1} parent=35 // pred_check_branch
          %864 = sbr.rel (%p862) target = $region40
        $region39: #{tpu_custom_call.1} parent=35 // pred_region
          %s865 = smul.u32 2, %s23
          %s867 = ssub.s32 256, 256
          %868 = vsyncadd %s858, %s867
          %s869 = smul.addr %s22, 2
          %s870 = sadd.s32 %s865, %s869
          %s871 = smul.addr %s870, 128
          %s872 = scalar_lea.hbm %s4, %s871
          %s874 = sshll.u32 %s861, 4
          %s875 = int_to_ptr.vmem [resolvable:$true] %s874
          %877 = dma.vmem_to_hbm [thread:$0]  %s875, 256, %s872, %s858
        $region40: #{tpu_custom_call.1} parent=35 // pred_fallthru
          _
      $region36: #{tpu_custom_call.1} parent=5 // pred_fallthru
        _
      %p878 = scmp.le.s32.totalorder 2, %s13
      // Predicated region
      $region41: #{tpu_custom_call.1} parent=5 // pred_check
        %p879 = pneg %p878
      $region42: #{tpu_custom_call.1} parent=5 // pred_check_branch
        %881 = sbr.rel (%p879) target = $region44
      $region43: #{tpu_custom_call.1} parent=5 // pred_region
        %s882 = ssub.s32 %s13, 2
        // Predicated region
        $region45: #{tpu_custom_call.1} parent=43 // pred_check
          %p883 = pneg %p156
        $region46: #{tpu_custom_call.1} parent=43 // pred_check_branch
          %885 = sbr.rel (%p883) target = $region48
        $region47: #{tpu_custom_call.1} parent=43 // pred_region
          %s886 = sand.u32 %s141, 1
          %s887 = scalar_lea.sflag [#allocation3], %s886
          %s888 = sand.u32 %s141, 1
          %s889 = smul.addr %s888, 16
          %s890 = scalar_lea.vmem [#allocation2], %s889
          %891 = dma.done %s887, 256
        $region48: #{tpu_custom_call.1} parent=43 // pred_fallthru
          _
      $region44: #{tpu_custom_call.1} parent=5 // pred_fallthru
        _
    $region6: #{tpu_custom_call.1} parent=1 // loop_footer
      %s17 = sadd.s32 1, %s13
    $region7: #{tpu_custom_call.1} parent=1 // loop_footer_branch
      %12 = sbr.rel target = $region3
    $region8: #{tpu_custom_call.1} parent=1 // loop_exit
      _
    %892 = vsyncpa [#allocation3], 1
    %s893 = scalar_lea.sflag [#allocation3], 1
    %894 = vsyncpa %s893, 1

</llo_original>
